<compile_context>
chip_gen: v7x
topology: tpu7x:2x2x1
jax: 0.10.0
libtpu: 0.0.40
codegen_flags: <defaults>
</compile_context>

<pallas_src>
import functools

import jax
import jax.numpy as jnp
from jax.experimental import pallas as pl
from jax.experimental.pallas import tpu as pltpu

LANE = 128


def _round_up(x, m):
    return (x + m - 1) // m * m


def _cdiv(a, b):
    return (a + b - 1) // b


# ---------------------------------------------------------------------------
# Kernel 1: projection.
#   XW = X_scaled @ W (f32 accumulation), emitted as an exact bf16 hi/lo pair
#   so kernel 2 can stay on the native bf16 MXU path.
# ---------------------------------------------------------------------------
def _project_kernel(x_ref, w_ref, hi_ref, lo_ref):
    xw = jnp.dot(x_ref[...], w_ref[...], preferred_element_type=jnp.float32)
    hi = xw.astype(jnp.bfloat16)
    hi_ref[...] = hi
    # residual is tiny relative to xw, so the f32 subtraction is exact and the
    # bf16 round-off of the residual is ~2^-17 * |xw|  (well under 1e-4).
    lo_ref[...] = (xw - hi.astype(jnp.float32)).astype(jnp.bfloat16)


# ---------------------------------------------------------------------------
# Kernel 2: aggregation.
#   out[i] = norm_dst[i] * sum_k A[i, k] @ XW[k] + b
# ---------------------------------------------------------------------------
def _aggregate_kernel(a_ref, xwh_ref, xwl_ref, nd_ref, b_ref, o_ref, *, tile_k):
    k = pl.program_id(1)

    @pl.when(k == 0)
    def _():
        o_ref[...] = jnp.zeros_like(o_ref)

    # int8 {0,1} -> bf16 widening: exact, cheap, hidden under the A DMA.
    a = a_ref[...].astype(jnp.bfloat16)                       # (tile_i, tile_k)
    s = pl.multiple_of(k * tile_k, tile_k)
    xwh = xwh_ref[pl.ds(s, tile_k), :]                        # (tile_k, Fp) bf16
    xwl = xwl_ref[pl.ds(s, tile_k), :]
    # two native bf16 MXU matmuls with f32 accumulation; exact because A is 0/1
    o_ref[...] += (jnp.dot(a, xwh, preferred_element_type=jnp.float32)
                   + jnp.dot(a, xwl, preferred_element_type=jnp.float32))

    @pl.when(k == pl.num_programs(1) - 1)
    def _():
        o_ref[...] = nd_ref[...] * o_ref[...] + b_ref[...]


def gcn_forward(adj, feats, weight, bias):
    """Single dglnn.GraphConv (norm='both', weight=True, bias=True) forward.

    `adj` must be a dense {0,1} adjacency matrix (weighted edges would be
    truncated by the int8 packing).
    """
    N = adj.shape[0]
    F_in = feats.shape[1]
    F_out = weight.shape[1]

    # ---- O(N^2) prepass on a compact int8 copy of A ------------------------
    # Both degree reductions read the 1-byte copy instead of the f32 array;
    # callers that reuse the graph across steps should pass int8 directly.
    adj_i8 = adj.astype(jnp.int8)
    deg_src = jnp.maximum(jnp.sum(adj_i8, axis=0, dtype=jnp.float32), 1.0)  # (N,)
    deg_dst = jnp.maximum(jnp.sum(adj_i8, axis=1, dtype=jnp.float32), 1.0)  # (N,)
    norm_src = jax.lax.rsqrt(deg_src)[:, None]                              # (N,1)
    norm_dst = jax.lax.rsqrt(deg_dst)[:, None]                              # (N,1)

    # Fold norm_src into X here (fuses with the pad copy below), so kernel 1
    # needs no extra operand / VPU multiply.
    x_scaled = feats * norm_src

    # ---- tiling ------------------------------------------------------------
    Fp = _round_up(F_out, LANE)               # lane-dense output width

    # Reduction (source-node) axis: pad to a lane multiple, pick the largest
    # k-tile <= 2048 that divides it (long contiguous DMAs, few grid steps).
    Nk = _round_up(N, LANE)
    tile_k = LANE
    for cand in range(min(2048, Nk), LANE - 1, -LANE):
        if Nk % cand == 0:
            tile_k = cand
            break

    # Row (destination-node) axis: multiple of 32 (int8 sublane packing) and
    # small enough that the "parallel" axis has >= 2 tiles (v7x megacore).
    tile_i = min(256, _round_up(max(_cdiv(N, 2), 8), 32))
    Nr = _round_up(N, tile_i)
    n_row = Nr // tile_i
    n_col = Nk // tile_k

    # ---- padding (skipped when shapes already line up) ----------------------
    if (Nr, Nk) == (N, N):
        adj_p = adj_i8
    else:
        adj_p = jnp.zeros((Nr, Nk), jnp.int8).at[:N, :N].set(adj_i8)
    if Nk == N:
        x_p = x_scaled.astype(jnp.float32)
    else:
        x_p = jnp.zeros((Nk, F_in), jnp.float32).at[:N, :].set(x_scaled)
    w_p = jnp.zeros((F_in, Fp), jnp.float32).at[:, :F_out].set(weight)
    b_p = jnp.zeros((1, Fp), jnp.float32).at[:, :F_out].set(
        jnp.reshape(bias, (1, F_out)))
    nd_p = jnp.ones((Nr, 1), jnp.float32).at[:N, :].set(norm_dst)

    # ---- kernel 1: XW = X_scaled @ W, split into exact bf16 hi/lo -----------
    xw_hi, xw_lo = pl.pallas_call(
        _project_kernel,
        out_shape=(jax.ShapeDtypeStruct((Nk, Fp), jnp.bfloat16),
                   jax.ShapeDtypeStruct((Nk, Fp), jnp.bfloat16)),
        grid_spec=pltpu.PrefetchScalarGridSpec(
            num_scalar_prefetch=0,
            grid=(Nk // tile_k,),
            in_specs=[
                pl.BlockSpec((tile_k, F_in), lambda i: (i, 0)),   # X (scaled)
                pl.BlockSpec((F_in, Fp), lambda i: (0, 0)),       # W (resident)
            ],
            out_specs=[
                pl.BlockSpec((tile_k, Fp), lambda i: (i, 0)),     # XW hi
                pl.BlockSpec((tile_k, Fp), lambda i: (i, 0)),     # XW lo
            ],
        ),
        compiler_params=pltpu.CompilerParams(
            dimension_semantics=("parallel",)),
        cost_estimate=pl.CostEstimate(
            flops=2 * Nk * F_in * Fp,
            transcendentals=0,
            bytes_accessed=4 * (Nk * F_in + F_in * Fp) + 2 * 2 * Nk * Fp),
    )(x_p, w_p)

    # ---- kernel 2: out = norm_dst * (A @ XW) + b -----------------------------
    # Explicit VMEM budget (resident XW hi/lo + double-buffered A / out) so the
    # same config also fits v7x's 64 MiB physical VMEM.
    vmem_est = (2 * tile_i * tile_k            # A int8, double buffered
                + 2 * 2 * Nk * Fp * 2          # XW hi+lo bf16 (resident)
                + 2 * tile_i * Fp * 4          # out f32, double buffered
                + 2 * tile_i * LANE * 4        # norm_dst (lane padded 1->128)
                + 2 * 8 * Fp * 4)              # bias
    vmem_limit = int(min(max(2 * vmem_est, 32 * 2**20), 100 * 2**20))

    out_p = pl.pallas_call(
        functools.partial(_aggregate_kernel, tile_k=tile_k),
        out_shape=jax.ShapeDtypeStruct((Nr, Fp), jnp.float32),
        grid_spec=pltpu.PrefetchScalarGridSpec(
            num_scalar_prefetch=0,
            grid=(n_row, n_col),
            in_specs=[
                pl.BlockSpec((tile_i, tile_k), lambda i, k: (i, k)),  # A int8
                pl.BlockSpec((Nk, Fp), lambda i, k: (0, 0)),          # XW hi
                pl.BlockSpec((Nk, Fp), lambda i, k: (0, 0)),          # XW lo
                pl.BlockSpec((tile_i, 1), lambda i, k: (i, 0)),       # norm_dst
                pl.BlockSpec((1, Fp), lambda i, k: (0, 0)),           # bias
            ],
            out_specs=pl.BlockSpec((tile_i, Fp), lambda i, k: (i, 0)),
        ),
        compiler_params=pltpu.CompilerParams(
            dimension_semantics=("parallel", "arbitrary"),
            vmem_limit_bytes=vmem_limit),
        cost_estimate=pl.CostEstimate(
            flops=2 * 2 * Nr * Nk * Fp,
            transcendentals=0,
            bytes_accessed=(Nr * Nk                 # A, int8, read once
                            + 2 * 2 * Nk * Fp      # XW hi/lo, read once
                            + 4 * Nr * Fp          # out write
                            + 4 * Nr + 4 * Fp)),   # norm_dst + bias
    )(adj_p, xw_hi, xw_lo, nd_p, b_p)

    return out_p[:N, :F_out]


if __name__ == "__main__":
    key = jax.random.PRNGKey(0)
    k_adj, k_feat, k_w, k_b = jax.random.split(key, 4)

    N = 64        # number of nodes
    F_IN = 32     # in_size
    F_OUT = 16    # out_size

    # Synthetic SBM-like symmetric adjacency (no self loops), strictly {0,1}.
    upper = jax.random.bernoulli(k_adj, p=0.15, shape=(N, N)).astype(jnp.float32)
    adj = jnp.triu(upper, k=1)
    adj = adj + adj.T

    feats = jax.random.normal(k_feat, (N, F_IN), dtype=jnp.float32)

    # Glorot-style weight + small random bias (matches dglnn.GraphConv shapes).
    limit = (6.0 / (F_IN + F_OUT)) ** 0.5
    weight = jax.random.uniform(
        k_w, (F_IN, F_OUT), minval=-limit, maxval=limit, dtype=jnp.float32)
    bias = 0.1 * jax.random.normal(k_b, (F_OUT,), dtype=jnp.float32)

    out = gcn_forward(adj, feats, weight, bias)
    jax.block_until_ready(out)

    # Pure-JAX f32 reference of the same math.
    deg_src = jnp.maximum(adj.sum(axis=0, keepdims=True), 1.0) ** -0.5
    deg_dst = jnp.maximum(adj.sum(axis=1, keepdims=True), 1.0) ** -0.5
    ref = (deg_dst * adj * deg_src) @ feats @ weight + bias
    assert jnp.allclose(out, ref, atol=1e-4, rtol=1e-4), \
        float(jnp.max(jnp.abs(out - ref)))

    print("KERNEL_OK")
</pallas_src>

<mosaic_0001>
module attributes {stable_mosaic.version = 11 : i64} {
  func.func @_project_kernel(%arg0: i32, %arg1: memref<128x32xf32, #tpu.memory_space<vmem>>, %arg2: memref<32x128xf32, #tpu.memory_space<vmem>>, %arg3: memref<128x128xbf16, #tpu.memory_space<vmem>>, %arg4: memref<128x128xbf16, #tpu.memory_space<vmem>>) attributes {dimension_semantics = [#tpu.dimension_semantics<parallel>], iteration_bounds = array<i64: 1>, scalar_prefetch = 0 : i64, scratch_operands = 0 : i64, tpu.core_type = #tpu.core_type<tc>, window_params = [{transform_indices = @transform_0, window_bounds = array<i64: 128, 32>}, {pipeline_mode = #tpu.pipeline_mode<synchronous>, transform_indices = @transform_1, window_bounds = array<i64: 32, 128>}, {transform_indices = @transform_2, window_bounds = array<i64: 128, 128>}, {transform_indices = @transform_3, window_bounds = array<i64: 128, 128>}]} {
    %c0 = arith.constant 0 : index
    %c0_0 = arith.constant 0 : index
    %0 = vector.load %arg1[%c0, %c0_0] : memref<128x32xf32, #tpu.memory_space<vmem>>, vector<128x32xf32>
    %c0_1 = arith.constant 0 : index
    %c0_2 = arith.constant 0 : index
    %1 = vector.load %arg2[%c0_1, %c0_2] : memref<32x128xf32, #tpu.memory_space<vmem>>, vector<32x128xf32>
    %cst = arith.constant dense<0.000000e+00> : vector<128x128xf32>
    %2 = tpu.matmul %0, %1, %cst {dimension_numbers = #tpu.dot_dimension_numbers<[1], [0], [0], [1], [0, 0, 1, 1], [], []>} : vector<128x32xf32>, vector<32x128xf32>, vector<128x128xf32> -> vector<128x128xf32>
    %3 = arith.truncf %2 : vector<128x128xf32> to vector<128x128xbf16>
    %c0_3 = arith.constant 0 : index
    %c0_4 = arith.constant 0 : index
    %4 = vector.load %arg3[%c0_3, %c0_4] : memref<128x128xbf16, #tpu.memory_space<vmem>>, vector<128x128xbf16>
    tpu.vector_store %arg3[%c0_3, %c0_4], %3 {strides = array<i32>} : memref<128x128xbf16, #tpu.memory_space<vmem>>, vector<128x128xbf16>,
    %5 = arith.extf %3 : vector<128x128xbf16> to vector<128x128xf32>
    %6 = arith.subf %2, %5 : vector<128x128xf32>
    %7 = arith.truncf %6 : vector<128x128xf32> to vector<128x128xbf16>
    %c0_5 = arith.constant 0 : index
    %c0_6 = arith.constant 0 : index
    %8 = vector.load %arg4[%c0_5, %c0_6] : memref<128x128xbf16, #tpu.memory_space<vmem>>, vector<128x128xbf16>
    tpu.vector_store %arg4[%c0_5, %c0_6], %7 {strides = array<i32>} : memref<128x128xbf16, #tpu.memory_space<vmem>>, vector<128x128xbf16>,
    return
  }
  func.func @transform_0(%arg0: i32) -> (i32, i32) {
    %c0_i32 = arith.constant 0 : i32
    %c0_i32_0 = arith.constant 0 : i32
    return %arg0, %c0_i32 : i32, i32
  }
  func.func @transform_1(%arg0: i32) -> (i32, i32) {
    %c0_i32 = arith.constant 0 : i32
    %c0_i32_0 = arith.constant 0 : i32
    %c0_i32_1 = arith.constant 0 : i32
    return %c0_i32, %c0_i32_0 : i32, i32
  }
  func.func @transform_2(%arg0: i32) -> (i32, i32) {
    %c0_i32 = arith.constant 0 : i32
    %c0_i32_0 = arith.constant 0 : i32
    return %arg0, %c0_i32 : i32, i32
  }
  func.func @transform_3(%arg0: i32) -> (i32, i32) {
    %c0_i32 = arith.constant 0 : i32
    %c0_i32_0 = arith.constant 0 : i32
    return %arg0, %c0_i32 : i32, i32
  }
}

</mosaic_0001>

<llo_original>
// kernel: tpu_custom_call.1
$region0: #{tpu_custom_call.1}
  #allocation0 [shape = 'u32[]', space=smem, size = 0x4, offset = 0x4, fixed_abs, tag = 'smem constant byte address 0x4 - core index']
  #allocation1 [shape = 'u32[144,128]{1,0:T(1,128)}', space=vmem, size = 0x12000, scoped, tag = 'internal scratch']
  %s0 = inlined_call_operand.vmem [shape: f32[128,32], index: 0, kind: input, shape index: {}]
  %s1 = inlined_call_operand.vmem [shape: f32[32,128], index: 1, kind: input, shape index: {}]
  %s2 = inlined_call_operand.hbm [shape: bf16[128,128], index: 2, kind: output, shape index: {0}]
  %s3 = inlined_call_operand.hbm [shape: bf16[128,128], index: 3, kind: output, shape index: {1}]
  %4 = xla_tuple %s2, %s3
  %s5 = sld [smem:[#allocation0]]
  $region26: #{tpu_custom_call.1} parent=0
    _
  %s7 = ssub.s32 1, %s5
  %s8 = scalar_select 0, %s7, %s5
  $region1: #{tpu_custom_call.1} parent=0
    #allocation2 [shape = 'u8[32768]{0}', space=vmem, size = 0x8000, scoped, tag = 'output window, operand 0, single buffered']
    #allocation3 [shape = 's32[1]{0}', space=sflag, size = 0x4, scoped, tag = 'scoped memory for tpu_custom_call.1']
    #allocation4 [shape = 'u8[32768]{0}', space=vmem, size = 0x8000, scoped, tag = 'output window, operand 1, single buffered']
    #allocation5 [shape = 's32[1]{0}', space=sflag, size = 0x4, scoped, tag = 'scoped memory for tpu_custom_call.1']
    %9 = vsyncpa [#allocation3], 0
    %10 = vsyncpa [#allocation5], 0
    // Predicated region
    $region2: #{tpu_custom_call.1} parent=1 // pred_check
      _
    $region3: #{tpu_custom_call.1} parent=1 // pred_check_branch
      %12 = sbr.rel (0) target = $region5
    $region4: #{tpu_custom_call.1} parent=1 // pred_region
      _
    $region5: #{tpu_custom_call.1} parent=1 // pred_fallthru
      _
    // Predicated region
    $region6: #{tpu_custom_call.1} parent=1 // pred_check
      _
    $region7: #{tpu_custom_call.1} parent=1 // pred_check_branch
      %14 = sbr.rel (0) target = $region9
    $region8: #{tpu_custom_call.1} parent=1 // pred_region
      _
    $region9: #{tpu_custom_call.1} parent=1 // pred_fallthru
      _
    %v15 = vld [vmem:[%s0] sm:$0xff]
    %v16 = vld [vmem:[%s0 + $0x8] sm:$0xff]
    %v17 = vld [vmem:[%s0 + $0x10] sm:$0xff]
    %v18 = vld [vmem:[%s0 + $0x18] sm:$0xff]
    %v19 = vld [vmem:[%s0 + $0x20] sm:$0xff]
    %v20 = vld [vmem:[%s0 + $0x28] sm:$0xff]
    %v21 = vld [vmem:[%s0 + $0x30] sm:$0xff]
    %v22 = vld [vmem:[%s0 + $0x38] sm:$0xff]
    %v23 = vld [vmem:[%s0 + $0x40] sm:$0xff]
    %v24 = vld [vmem:[%s0 + $0x48] sm:$0xff]
    %v25 = vld [vmem:[%s0 + $0x50] sm:$0xff]
    %v26 = vld [vmem:[%s0 + $0x58] sm:$0xff]
    %v27 = vld [vmem:[%s0 + $0x60] sm:$0xff]
    %v28 = vld [vmem:[%s0 + $0x68] sm:$0xff]
    %v29 = vld [vmem:[%s0 + $0x70] sm:$0xff]
    %v30 = vld [vmem:[%s0 + $0x78] sm:$0xff]
    %v31 = vld [vmem:[%s1] sm:$0xff]
    %v32 = vld [vmem:[%s1 + $0x8] sm:$0xff]
    %v33 = vld [vmem:[%s1 + $0x10] sm:$0xff]
    %v34 = vld [vmem:[%s1 + $0x18] sm:$0xff]
    %vm35 = vcmask 261120
    %v37 = vsel %vm35, %v15, 0
    %v40 = vsel %vm35, %v16, 0
    %v43 = vsel %vm35, %v17, 0
    %v46 = vsel %vm35, %v18, 0
    %v49 = vsel %vm35, %v19, 0
    %v52 = vsel %vm35, %v20, 0
    %v55 = vsel %vm35, %v21, 0
    %v58 = vsel %vm35, %v22, 0
    %v61 = vsel %vm35, %v23, 0
    %v64 = vsel %vm35, %v24, 0
    %v67 = vsel %vm35, %v25, 0
    %v70 = vsel %vm35, %v26, 0
    %v73 = vsel %vm35, %v27, 0
    %v76 = vsel %vm35, %v28, 0
    %v79 = vsel %vm35, %v29, 0
    %v82 = vsel %vm35, %v30, 0
    %84 = vmatprep.subr.mxu0 0.0
    %85 = vmatpush1.msra.mxu0 %v31
    %86 = vmatprep.subr.mxu0 0.0
    %87 = vmatpush1.msra.mxu0 %v32
    %88 = vmatprep.subr.mxu0 0.0
    %89 = vmatpush1.msra.mxu0 %v33
    %90 = vmatprep.subr.mxu0 0.0
    %91 = vmatpush1.msra.mxu0 %v34
    %92 = vmatprep.subr.mxu0 0.0
    %93 = vmatpush1.msra.mxu0 0.0
    %94 = vmatprep.subr.mxu0 0.0
    %95 = vmatpush1.msra.mxu0 0.0
    %96 = vmatprep.subr.mxu0 0.0
    %97 = vmatpush1.msra.mxu0 0.0
    %98 = vmatprep.subr.mxu0 0.0
    %99 = vmatpush1.msra.mxu0 0.0
    %100 = vmatprep.subr.mxu0 0.0
    %101 = vmatpush1.msra.mxu0 0.0
    %102 = vmatprep.subr.mxu0 0.0
    %103 = vmatpush1.msra.mxu0 0.0
    %104 = vmatprep.subr.mxu0 0.0
    %105 = vmatpush1.msra.mxu0 0.0
    %106 = vmatprep.subr.mxu0 0.0
    %107 = vmatpush1.msra.mxu0 0.0
    %108 = vmatprep.subr.mxu0 0.0
    %109 = vmatpush1.msra.mxu0 0.0
    %110 = vmatprep.subr.mxu0 0.0
    %111 = vmatpush1.msra.mxu0 0.0
    %112 = vmatprep.subr.mxu0 0.0
    %113 = vmatpush1.msra.mxu0 0.0
    %114 = vmatprep.subr.mxu0 0.0
    %115 = vmatpush1.msra.mxu0 0.0
    %116 = vmatprep.subr.mxu0 0.0
    %117 = vmatpush1.msra.mxu0 0.0
    %118 = vmatprep.subr.mxu0 0.0
    %119 = vmatpush1.msra.mxu0 0.0
    %120 = vmatprep.subr.mxu0 0.0
    %121 = vmatpush1.msra.mxu0 0.0
    %122 = vmatprep.subr.mxu0 0.0
    %123 = vmatpush1.msra.mxu0 0.0
    %124 = vmatprep.subr.mxu0 0.0
    %125 = vmatpush1.msra.mxu0 0.0
    %126 = vmatprep.subr.mxu0 0.0
    %127 = vmatpush1.msra.mxu0 0.0
    %128 = vmatprep.subr.mxu0 0.0
    %129 = vmatpush1.msra.mxu0 0.0
    %130 = vmatprep.subr.mxu0 0.0
    %131 = vmatpush1.msra.mxu0 0.0
    %132 = vmatprep.subr.mxu0 0.0
    %133 = vmatpush1.msra.mxu0 0.0
    %134 = vmatprep.subr.mxu0 0.0
    %135 = vmatpush1.msra.mxu0 0.0
    %136 = vmatprep.subr.mxu0 0.0
    %137 = vmatpush1.msra.mxu0 0.0
    %138 = vmatprep.subr.mxu0 0.0
    %139 = vmatpush1.msra.mxu0 0.0
    %140 = vmatprep.subr.mxu0 0.0
    %141 = vmatpush1.msra.mxu0 0.0
    %142 = vmatprep.subr.mxu0 0.0
    %143 = vmatpush1.msra.mxu0 0.0
    %144 = vmatprep.subr.mxu0 0.0
    %145 = vmatpush1.msra.mxu0 0.0
    %146 = vmatprep.subr.mxu0 0.0
    %147 = vmatpush1.msra.mxu0 0.0
    %148 = vmatprep.mubr.f32.mxu0 0.0
    %149 = vmatmul.mubr.f32.gmra.mrb[0].mxu0 %v37
    %v150 = vpop.f32.mrb[0].mxu0
    %v151 = vadd.f32 0.0, %v150
    %v152 = vpop.f32.mrb[0].mxu0
    %153 = vmatprep.mubr.f32.mxu0 0.0
    %154 = vmatmul.mubr.f32.gmra.mrb[0].mxu0 %v40
    %v155 = vpop.f32.mrb[0].mxu0
    %v156 = vadd.f32 0.0, %v155
    %v157 = vpop.f32.mrb[0].mxu0
    %158 = vmatprep.mubr.f32.mxu0 0.0
    %159 = vmatmul.mubr.f32.gmra.mrb[0].mxu0 %v43
    %v160 = vpop.f32.mrb[0].mxu0
    %v161 = vadd.f32 0.0, %v160
    %v162 = vpop.f32.mrb[0].mxu0
    %163 = vmatprep.mubr.f32.mxu0 0.0
    %164 = vmatmul.mubr.f32.gmra.mrb[0].mxu0 %v46
    %v165 = vpop.f32.mrb[0].mxu0
    %v166 = vadd.f32 0.0, %v165
    %v167 = vpop.f32.mrb[0].mxu0
    %168 = vmatprep.mubr.f32.mxu0 0.0
    %169 = vmatmul.mubr.f32.gmra.mrb[0].mxu0 %v49
    %v170 = vpop.f32.mrb[0].mxu0
    %v171 = vadd.f32 0.0, %v170
    %v172 = vpop.f32.mrb[0].mxu0
    %173 = vmatprep.mubr.f32.mxu0 0.0
    %174 = vmatmul.mubr.f32.gmra.mrb[0].mxu0 %v52
    %v175 = vpop.f32.mrb[0].mxu0
    %v176 = vadd.f32 0.0, %v175
    %v177 = vpop.f32.mrb[0].mxu0
    %178 = vmatprep.mubr.f32.mxu0 0.0
    %179 = vmatmul.mubr.f32.gmra.mrb[0].mxu0 %v55
    %v180 = vpop.f32.mrb[0].mxu0
    %v181 = vadd.f32 0.0, %v180
    %v182 = vpop.f32.mrb[0].mxu0
    %183 = vmatprep.mubr.f32.mxu0 0.0
    %184 = vmatmul.mubr.f32.gmra.mrb[0].mxu0 %v58
    %v185 = vpop.f32.mrb[0].mxu0
    %v186 = vadd.f32 0.0, %v185
    %v187 = vpop.f32.mrb[0].mxu0
    %188 = vmatprep.mubr.f32.mxu0 0.0
    %189 = vmatmul.mubr.f32.gmra.mrb[0].mxu0 %v61
    %v190 = vpop.f32.mrb[0].mxu0
    %v191 = vadd.f32 0.0, %v190
    %v192 = vpop.f32.mrb[0].mxu0
    %193 = vmatprep.mubr.f32.mxu0 0.0
    %194 = vmatmul.mubr.f32.gmra.mrb[0].mxu0 %v64
    %v195 = vpop.f32.mrb[0].mxu0
    %v196 = vadd.f32 0.0, %v195
    %v197 = vpop.f32.mrb[0].mxu0
    %198 = vmatprep.mubr.f32.mxu0 0.0
    %199 = vmatmul.mubr.f32.gmra.mrb[0].mxu0 %v67
    %v200 = vpop.f32.mrb[0].mxu0
    %v201 = vadd.f32 0.0, %v200
    %v202 = vpop.f32.mrb[0].mxu0
    %203 = vmatprep.mubr.f32.mxu0 0.0
    %204 = vmatmul.mubr.f32.gmra.mrb[0].mxu0 %v70
    %v205 = vpop.f32.mrb[0].mxu0
    %v206 = vadd.f32 0.0, %v205
    %v207 = vpop.f32.mrb[0].mxu0
    %208 = vmatprep.mubr.f32.mxu0 0.0
    %209 = vmatmul.mubr.f32.gmra.mrb[0].mxu0 %v73
    %v210 = vpop.f32.mrb[0].mxu0
    %v211 = vadd.f32 0.0, %v210
    %v212 = vpop.f32.mrb[0].mxu0
    %213 = vmatprep.mubr.f32.mxu0 0.0
    %214 = vmatmul.mubr.f32.gmra.mrb[0].mxu0 %v76
    %v215 = vpop.f32.mrb[0].mxu0
    %v216 = vadd.f32 0.0, %v215
    %v217 = vpop.f32.mrb[0].mxu0
    %218 = vmatprep.mubr.f32.mxu0 0.0
    %219 = vmatmul.mubr.f32.gmra.mrb[0].mxu0 %v79
    %v220 = vpop.f32.mrb[0].mxu0
    %v221 = vadd.f32 0.0, %v220
    %v222 = vpop.f32.mrb[0].mxu0
    %223 = vmatprep.mubr.f32.mxu0 0.0
    %224 = vmatmul.mubr.f32.gmra.mrb[0].mxu0 %v82
    %v225 = vpop.f32.mrb[0].mxu0
    %v226 = vadd.f32 0.0, %v225
    %v227 = vpop.f32.mrb[0].mxu0
    %228 = vdwg.mxu0
    %v229 = vpack.c.bf16 %v156, %v151
    %v230 = vpack.c.bf16 %v166, %v161
    %v231 = vpack.c.bf16 %v176, %v171
    %v232 = vpack.c.bf16 %v186, %v181
    %v233 = vpack.c.bf16 %v196, %v191
    %v234 = vpack.c.bf16 %v206, %v201
    %v235 = vpack.c.bf16 %v216, %v211
    %v236 = vpack.c.bf16 %v226, %v221
    %v245 = vunpack.c.l.b16 %v229
    %v246 = vunpack.c.h.b16 %v229
    %v247 = vunpack.c.l.b16 %v230
    %v248 = vunpack.c.h.b16 %v230
    %v249 = vunpack.c.l.b16 %v231
    %v250 = vunpack.c.h.b16 %v231
    %v251 = vunpack.c.l.b16 %v232
    %v252 = vunpack.c.h.b16 %v232
    %v253 = vunpack.c.l.b16 %v233
    %v254 = vunpack.c.h.b16 %v233
    %v255 = vunpack.c.l.b16 %v234
    %v256 = vunpack.c.h.b16 %v234
    %v257 = vunpack.c.l.b16 %v235
    %v258 = vunpack.c.h.b16 %v235
    %v259 = vunpack.c.l.b16 %v236
    %v260 = vunpack.c.h.b16 %v236
    %v261 = vpack.c.b16 %v245, %v245
    %v262 = vpack.c.b16 %v246, %v246
    %v263 = vpack.c.b16 %v247, %v247
    %v264 = vpack.c.b16 %v248, %v248
    %v265 = vpack.c.b16 %v249, %v249
    %v266 = vpack.c.b16 %v250, %v250
    %v267 = vpack.c.b16 %v251, %v251
    %v268 = vpack.c.b16 %v252, %v252
    %v269 = vpack.c.b16 %v253, %v253
    %v270 = vpack.c.b16 %v254, %v254
    %v271 = vpack.c.b16 %v255, %v255
    %v272 = vpack.c.b16 %v256, %v256
    %v273 = vpack.c.b16 %v257, %v257
    %v274 = vpack.c.b16 %v258, %v258
    %v275 = vpack.c.b16 %v259, %v259
    %v276 = vpack.c.b16 %v260, %v260
    %293 = vst [vmem:[#allocation2] sm:$0xf] %v261
    %294 = vst [vmem:[#allocation2 + $0x4] sm:$0xf] %v262
    %295 = vst [vmem:[#allocation2 + $0x8] sm:$0xf] %v263
    %296 = vst [vmem:[#allocation2 + $0xc] sm:$0xf] %v264
    %297 = vst [vmem:[#allocation2 + $0x10] sm:$0xf] %v265
    %298 = vst [vmem:[#allocation2 + $0x14] sm:$0xf] %v266
    %299 = vst [vmem:[#allocation2 + $0x18] sm:$0xf] %v267
    %300 = vst [vmem:[#allocation2 + $0x1c] sm:$0xf] %v268
    %301 = vst [vmem:[#allocation2 + $0x20] sm:$0xf] %v269
    %302 = vst [vmem:[#allocation2 + $0x24] sm:$0xf] %v270
    %303 = vst [vmem:[#allocation2 + $0x28] sm:$0xf] %v271
    %304 = vst [vmem:[#allocation2 + $0x2c] sm:$0xf] %v272
    %305 = vst [vmem:[#allocation2 + $0x30] sm:$0xf] %v273
    %306 = vst [vmem:[#allocation2 + $0x34] sm:$0xf] %v274
    %307 = vst [vmem:[#allocation2 + $0x38] sm:$0xf] %v275
    %308 = vst [vmem:[#allocation2 + $0x3c] sm:$0xf] %v276
    %v309 = vunpack.c.l.bf16 %v229
    %v310 = vunpack.c.h.bf16 %v229
    %v311 = vunpack.c.l.bf16 %v230
    %v312 = vunpack.c.h.bf16 %v230
    %v313 = vunpack.c.l.bf16 %v231
    %v314 = vunpack.c.h.bf16 %v231
    %v315 = vunpack.c.l.bf16 %v232
    %v316 = vunpack.c.h.bf16 %v232
    %v317 = vunpack.c.l.bf16 %v233
    %v318 = vunpack.c.h.bf16 %v233
    %v319 = vunpack.c.l.bf16 %v234
    %v320 = vunpack.c.h.bf16 %v234
    %v321 = vunpack.c.l.bf16 %v235
    %v322 = vunpack.c.h.bf16 %v235
    %v323 = vunpack.c.l.bf16 %v236
    %v324 = vunpack.c.h.bf16 %v236
    %v325 = vsub.f32 %v151, %v309
    %v326 = vsub.f32 %v156, %v310
    %v327 = vsub.f32 %v161, %v311
    %v328 = vsub.f32 %v166, %v312
    %v329 = vsub.f32 %v171, %v313
    %v330 = vsub.f32 %v176, %v314
    %v331 = vsub.f32 %v181, %v315
    %v332 = vsub.f32 %v186, %v316
    %v333 = vsub.f32 %v191, %v317
    %v334 = vsub.f32 %v196, %v318
    %v335 = vsub.f32 %v201, %v319
    %v336 = vsub.f32 %v206, %v320
    %v337 = vsub.f32 %v211, %v321
    %v338 = vsub.f32 %v216, %v322
    %v339 = vsub.f32 %v221, %v323
    %v340 = vsub.f32 %v226, %v324
    %v341 = vpack.c.bf16 %v326, %v325
    %v342 = vpack.c.bf16 %v328, %v327
    %v343 = vpack.c.bf16 %v330, %v329
    %v344 = vpack.c.bf16 %v332, %v331
    %v345 = vpack.c.bf16 %v334, %v333
    %v346 = vpack.c.bf16 %v336, %v335
    %v347 = vpack.c.bf16 %v338, %v337
    %v348 = vpack.c.bf16 %v340, %v339
    %v357 = vunpack.c.l.b16 %v341
    %v358 = vunpack.c.h.b16 %v341
    %v359 = vunpack.c.l.b16 %v342
    %v360 = vunpack.c.h.b16 %v342
    %v361 = vunpack.c.l.b16 %v343
    %v362 = vunpack.c.h.b16 %v343
    %v363 = vunpack.c.l.b16 %v344
    %v364 = vunpack.c.h.b16 %v344
    %v365 = vunpack.c.l.b16 %v345
    %v366 = vunpack.c.h.b16 %v345
    %v367 = vunpack.c.l.b16 %v346
    %v368 = vunpack.c.h.b16 %v346
    %v369 = vunpack.c.l.b16 %v347
    %v370 = vunpack.c.h.b16 %v347
    %v371 = vunpack.c.l.b16 %v348
    %v372 = vunpack.c.h.b16 %v348
    %v373 = vpack.c.b16 %v357, %v357
    %v374 = vpack.c.b16 %v358, %v358
    %v375 = vpack.c.b16 %v359, %v359
    %v376 = vpack.c.b16 %v360, %v360
    %v377 = vpack.c.b16 %v361, %v361
    %v378 = vpack.c.b16 %v362, %v362
    %v379 = vpack.c.b16 %v363, %v363
    %v380 = vpack.c.b16 %v364, %v364
    %v381 = vpack.c.b16 %v365, %v365
    %v382 = vpack.c.b16 %v366, %v366
    %v383 = vpack.c.b16 %v367, %v367
    %v384 = vpack.c.b16 %v368, %v368
    %v385 = vpack.c.b16 %v369, %v369
    %v386 = vpack.c.b16 %v370, %v370
    %v387 = vpack.c.b16 %v371, %v371
    %v388 = vpack.c.b16 %v372, %v372
    %405 = vst [vmem:[#allocation4] sm:$0xf] %v373
    %406 = vst [vmem:[#allocation4 + $0x4] sm:$0xf] %v374
    %407 = vst [vmem:[#allocation4 + $0x8] sm:$0xf] %v375
    %408 = vst [vmem:[#allocation4 + $0xc] sm:$0xf] %v376
    %409 = vst [vmem:[#allocation4 + $0x10] sm:$0xf] %v377
    %410 = vst [vmem:[#allocation4 + $0x14] sm:$0xf] %v378
    %411 = vst [vmem:[#allocation4 + $0x18] sm:$0xf] %v379
    %412 = vst [vmem:[#allocation4 + $0x1c] sm:$0xf] %v380
    %413 = vst [vmem:[#allocation4 + $0x20] sm:$0xf] %v381
    %414 = vst [vmem:[#allocation4 + $0x24] sm:$0xf] %v382
    %415 = vst [vmem:[#allocation4 + $0x28] sm:$0xf] %v383
    %416 = vst [vmem:[#allocation4 + $0x2c] sm:$0xf] %v384
    %417 = vst [vmem:[#allocation4 + $0x30] sm:$0xf] %v385
    %418 = vst [vmem:[#allocation4 + $0x34] sm:$0xf] %v386
    %419 = vst [vmem:[#allocation4 + $0x38] sm:$0xf] %v387
    %420 = vst [vmem:[#allocation4 + $0x3c] sm:$0xf] %v388
    // Predicated region
    $region10: #{tpu_custom_call.1} parent=1 // pred_check
      _
    $region11: #{tpu_custom_call.1} parent=1 // pred_check_branch
      %422 = sbr.rel (0) target = $region13
    $region12: #{tpu_custom_call.1} parent=1 // pred_region
      %s424 = ssub.s32 1024, 1024
      %425 = vsyncadd [#allocation3], %s424
      %s426 = sshll.u32 [#allocation2], 4
      %s427 = int_to_ptr.vmem [resolvable:$true] %s426
      %432 = dma.vmem_to_hbm [thread:$0]  %s427, 1024, %s2, [#allocation3], 64, 64, 4
    $region13: #{tpu_custom_call.1} parent=1 // pred_fallthru
      _
    // Predicated region
    $region14: #{tpu_custom_call.1} parent=1 // pred_check
      _
    $region15: #{tpu_custom_call.1} parent=1 // pred_check_branch
      %434 = sbr.rel (0) target = $region17
    $region16: #{tpu_custom_call.1} parent=1 // pred_region
      %s436 = ssub.s32 1024, 1024
      %437 = vsyncadd [#allocation5], %s436
      %s438 = sshll.u32 [#allocation4], 4
      %s439 = int_to_ptr.vmem [resolvable:$true] %s438
      %444 = dma.vmem_to_hbm [thread:$0]  %s439, 1024, %s3, [#allocation5], 64, 64, 4
    $region17: #{tpu_custom_call.1} parent=1 // pred_fallthru
      _
    // Predicated region
    $region18: #{tpu_custom_call.1} parent=1 // pred_check
      _
    $region19: #{tpu_custom_call.1} parent=1 // pred_check_branch
      %446 = sbr.rel (0) target = $region21
    $region20: #{tpu_custom_call.1} parent=1 // pred_region
      %447 = dma.done [#allocation3], 1024
    $region21: #{tpu_custom_call.1} parent=1 // pred_fallthru
      _
    // Predicated region
    $region22: #{tpu_custom_call.1} parent=1 // pred_check
      _
    $region23: #{tpu_custom_call.1} parent=1 // pred_check_branch
      %449 = sbr.rel (0) target = $region25
    $region24: #{tpu_custom_call.1} parent=1 // pred_region
      %450 = dma.done [#allocation5], 1024
    $region25: #{tpu_custom_call.1} parent=1 // pred_fallthru
      _
    %451 = vsyncpa [#allocation3], 1
    %452 = vsyncpa [#allocation5], 1

</llo_original>
